<compile_context>
chip_gen: v5e
topology: v5e:2x2
jax: 0.10.0
libtpu: 0.0.40
codegen_flags: <defaults>
</compile_context>

<pallas_src>
import math
from functools import partial

import jax
import jax.numpy as jnp
from jax.experimental import pallas as pl
from jax.experimental.pallas import tpu as pltpu


def _vmem_limit_bytes():
    """Generation-aware scoped-VMEM limit with headroom (v7x: 64 MiB physical)."""
    cap = 128 * 1024 * 1024
    try:
        info = pltpu.get_tpu_info()
        cap = int(getattr(info, "vmem_capacity_bytes", cap))
    except Exception:
        pass
    return min(96 * 1024 * 1024, (cap * 3) // 4)


_VMEM_LIMIT = _vmem_limit_bytes()


def _pick_tile(dim: int, cap: int) -> int:
    """Largest tile <= cap that divides dim; full dim if dim <= cap."""
    if dim <= cap:
        return dim
    t = cap
    while t >= 8:
        if dim % t == 0:
            return t
        t //= 2
    # TODO(synk): ill-shaped dims fall back to one full-size block (may be big).
    return dim


# ---------------------------------------------------------------------------
# Generic projection kernels (reduction over grid axis 2).
# ---------------------------------------------------------------------------
def _proj_kernel_direct(x_ref, w_ref, o_ref):
    # Single reduction step: write the f32 matmul result straight to o_ref
    # (no f32 scratch store/load/cast round trip).
    o_ref[...] = jnp.dot(x_ref[...], w_ref[...],
                         preferred_element_type=jnp.float32).astype(o_ref.dtype)


def _proj_kernel_acc(x_ref, w_ref, o_ref, acc_ref):
    @pl.when(pl.program_id(2) == 0)
    def _():
        acc_ref[...] = jnp.zeros(acc_ref.shape, acc_ref.dtype)

    acc_ref[...] += jnp.dot(x_ref[...], w_ref[...],
                            preferred_element_type=jnp.float32)

    @pl.when(pl.program_id(2) == pl.num_programs(2) - 1)
    def _():
        o_ref[...] = acc_ref[...].astype(o_ref.dtype)


# ---------------------------------------------------------------------------
# QKV projection:  (B*S, D) @ w_qkv[3H, D, hd]  ->  head-major (3H, B*S, hd)
# Grid order (row, head-slice, k): the x block index is constant across the
# head-slice axis, so Pallas re-uses the resident x block instead of re-DMAing.
# ---------------------------------------------------------------------------
def _qkv_projection(x_flat, w_qkv, *, tm_cap=512, tk_cap=512):
    M, K = x_flat.shape
    NH3, _, hd = w_qkv.shape
    tm = _pick_tile(M, tm_cap)
    tk = _pick_tile(K, tk_cap)
    k_steps = K // tk
    grid = (M // tm, NH3, k_steps)

    in_specs = [
        pl.BlockSpec((tm, tk), lambda i, n, k: (i, k)),
        pl.BlockSpec((None, tk, hd), lambda i, n, k: (n, k, 0)),
    ]
    out_specs = pl.BlockSpec((None, tm, hd), lambda i, n, k: (n, i, 0))

    if k_steps == 1:
        kernel, scratch = _proj_kernel_direct, []
    else:
        kernel, scratch = _proj_kernel_acc, [pltpu.VMEM((tm, hd), jnp.float32)]

    return pl.pallas_call(
        kernel,
        out_shape=jax.ShapeDtypeStruct((NH3, M, hd), x_flat.dtype),
        grid_spec=pltpu.PrefetchScalarGridSpec(
            num_scalar_prefetch=0,
            grid=grid,
            in_specs=in_specs,
            out_specs=out_specs,
            scratch_shapes=scratch,
        ),
        compiler_params=pltpu.CompilerParams(
            dimension_semantics=("parallel", "parallel", "arbitrary"),
            vmem_limit_bytes=_VMEM_LIMIT),
    )(x_flat, w_qkv)


# ---------------------------------------------------------------------------
# Flash-style causal attention over the head-major qkv buffer.
#   qkv_h : (3H, B*S, hd) bf16, rows [3h, 3h+1, 3h+2] are q/k/v of head h.
#   out   : (H, B*S, hd)  bf16 (head-major context, consumed by the O-proj).
# grid = (B*H, q_tiles, kv_tiles); kv axis is the sequential reduction axis.
# ---------------------------------------------------------------------------
def flash_attn_kernel(q_ref, k_ref, v_ref, o_ref, m_sc, l_sc, acc_sc,
                      *, tq: int, tk: int):
    qi = pl.program_id(1)
    ki = pl.program_id(2)

    @pl.when(ki == 0)
    def _():
        m_sc[...] = jnp.full(m_sc.shape, -jnp.inf, m_sc.dtype)
        l_sc[...] = jnp.zeros(l_sc.shape, l_sc.dtype)
        acc_sc[...] = jnp.zeros(acc_sc.shape, acc_sc.dtype)

    q_start = qi * tq
    k_start = ki * tk

    def tile_update(apply_mask: bool):
        q = q_ref[...]                                    # (tq, hd) bf16 (pre-scaled)
        k = k_ref[...]                                    # (tk, hd) bf16
        v = v_ref[...]                                    # (tk, hd) bf16
        # q @ k^T without materializing a transpose; sm_scale already folded
        # into the Q projection weights.
        s = jax.lax.dot_general(q, k, (((1,), (1,)), ((), ())),
                                preferred_element_type=jnp.float32)
        if apply_mask:
            row = q_start + jax.lax.broadcasted_iota(jnp.int32, (tq, tk), 0)
            col = k_start + jax.lax.broadcasted_iota(jnp.int32, (tq, tk), 1)
            # -1e9 fill matches the PyTorch module's masked_fill value.
            s = jnp.where(col > row, jnp.float32(-1e9), s)
        m_prev = m_sc[...]
        m_new = jnp.maximum(m_prev, jnp.max(s, axis=-1, keepdims=True))
        alpha = jnp.exp(m_prev - m_new)
        p = jnp.exp(s - m_new)                            # f32 softmax math
        l_sc[...] = alpha * l_sc[...] + jnp.sum(p, axis=-1, keepdims=True)
        acc_sc[...] = alpha * acc_sc[...] + jnp.dot(
            p.astype(v.dtype), v, preferred_element_type=jnp.float32)
        m_sc[...] = m_new

    has_unmasked = k_start <= q_start + tq - 1        # tile not fully above diagonal
    crosses_diag = k_start + tk - 1 > q_start         # tile needs the causal mask

    @pl.when(jnp.logical_and(has_unmasked, crosses_diag))
    def _():
        tile_update(True)

    @pl.when(jnp.logical_and(has_unmasked, jnp.logical_not(crosses_diag)))
    def _():
        tile_update(False)                              # interior tile: no mask work

    @pl.when(ki == pl.num_programs(2) - 1)
    def _():
        o_ref[...] = (acc_sc[...] *
                      pl.reciprocal(l_sc[...], approx=False)).astype(o_ref.dtype)


def _flash_attention(qkv_h, *, B, S, H, hd, tq_cap=256, tk_cap=512):
    BS = B * S
    tq = _pick_tile(S, tq_cap)
    tk = _pick_tile(S, tk_cap)
    q_tiles = S // tq
    kv_tiles = S // tk
    grid = (B * H, q_tiles, kv_tiles)

    def q_map(bh, qi, ki):
        return (3 * (bh % H), (bh // H) * q_tiles + qi, 0)

    def kv_map(t):
        def _map(bh, qi, ki):
            # Clamp to the last kv tile needed by this q tile: fully-masked
            # steps repeat the previous block index so Pallas skips the DMA.
            last = (qi * tq + tq - 1) // tk
            return (3 * (bh % H) + t,
                    (bh // H) * kv_tiles + jnp.minimum(ki, last), 0)
        return _map

    def o_map(bh, qi, ki):
        return (bh % H, (bh // H) * q_tiles + qi, 0)

    kernel = partial(flash_attn_kernel, tq=tq, tk=tk)
    return pl.pallas_call(
        kernel,
        out_shape=jax.ShapeDtypeStruct((H, BS, hd), qkv_h.dtype),
        grid_spec=pltpu.PrefetchScalarGridSpec(
            num_scalar_prefetch=0,
            grid=grid,
            in_specs=[
                pl.BlockSpec((None, tq, hd), q_map),
                pl.BlockSpec((None, tk, hd), kv_map(1)),
                pl.BlockSpec((None, tk, hd), kv_map(2)),
            ],
            out_specs=pl.BlockSpec((None, tq, hd), o_map),
            scratch_shapes=[
                pltpu.VMEM((tq, 1), jnp.float32),    # running max m
                pltpu.VMEM((tq, 1), jnp.float32),    # running denom l
                pltpu.VMEM((tq, hd), jnp.float32),   # running output acc
            ],
        ),
        compiler_params=pltpu.CompilerParams(
            dimension_semantics=("parallel", "parallel", "arbitrary"),
            vmem_limit_bytes=_VMEM_LIMIT),
    )(qkv_h, qkv_h, qkv_h)


# ---------------------------------------------------------------------------
# Output projection:  sum_h ctx_h[h] @ wo_h[h]  ->  (B*S, D)
# The head axis is the (sequential) reduction grid axis, so the head-major
# flash output is consumed directly — no XLA transpose/concat of heads.
# ---------------------------------------------------------------------------
def _out_projection(ctx_h, wo_h, *, out_dtype, tm_cap=512, tn_cap=512):
    H, M, hd = ctx_h.shape
    _, _, D = wo_h.shape
    tm = _pick_tile(M, tm_cap)
    tn = _pick_tile(D, tn_cap)
    grid = (M // tm, D // tn, H)

    in_specs = [
        pl.BlockSpec((None, tm, hd), lambda i, j, h: (h, i, 0)),
        pl.BlockSpec((None, hd, tn), lambda i, j, h: (h, 0, j)),
    ]
    out_specs = pl.BlockSpec((tm, tn), lambda i, j, h: (i, j))

    if H == 1:
        kernel, scratch = _proj_kernel_direct, []
    else:
        kernel, scratch = _proj_kernel_acc, [pltpu.VMEM((tm, tn), jnp.float32)]

    return pl.pallas_call(
        kernel,
        out_shape=jax.ShapeDtypeStruct((M, D), out_dtype),
        grid_spec=pltpu.PrefetchScalarGridSpec(
            num_scalar_prefetch=0,
            grid=grid,
            in_specs=in_specs,
            out_specs=out_specs,
            scratch_shapes=scratch,
        ),
        compiler_params=pltpu.CompilerParams(
            dimension_semantics=("parallel", "parallel", "arbitrary"),
            vmem_limit_bytes=_VMEM_LIMIT),
    )(ctx_h, wo_h)


# ---------------------------------------------------------------------------
# Full forward: head-major QKV projection -> flash attention -> O projection.
# ---------------------------------------------------------------------------
def mha_forward(x, wq, wk, wv, wo, num_heads, compute_dtype=jnp.bfloat16):
    B, S, D = x.shape
    H = num_heads
    hd = D // H
    sm_scale = 1.0 / math.sqrt(hd)

    # One-time weight layout plumbing on tiny (D,D) arrays:
    #   w_qkv[3*h + t] = W_t^T[:, h*hd:(h+1)*hd], with sm_scale folded into Q.
    wq_h = (wq.T * sm_scale).reshape(D, H, hd).transpose(1, 0, 2)   # (H, D, hd)
    wk_h = wk.T.reshape(D, H, hd).transpose(1, 0, 2)
    wv_h = wv.T.reshape(D, H, hd).transpose(1, 0, 2)
    w_qkv = jnp.stack([wq_h, wk_h, wv_h], axis=1).reshape(3 * H, D, hd)
    w_qkv = w_qkv.astype(compute_dtype)
    wo_h = wo.T.reshape(H, hd, D).astype(compute_dtype)             # (H, hd, D)

    x_flat = x.reshape(B * S, D).astype(compute_dtype)              # reshape only

    qkv_h = _qkv_projection(x_flat, w_qkv)                   # (3H, B*S, hd) bf16
    ctx_h = _flash_attention(qkv_h, B=B, S=S, H=H, hd=hd)    # (H, B*S, hd)  bf16
    out = _out_projection(ctx_h, wo_h, out_dtype=x.dtype)    # (B*S, D)
    return out.reshape(B, S, D)


# ---------------------------------------------------------------------------
# Pure-JAX reference mirroring the PyTorch forward (eval mode, f32).
# ---------------------------------------------------------------------------
def reference_mha(x, wq, wk, wv, wo, num_heads):
    B, S, D = x.shape
    hd = D // num_heads
    hp = "highest"
    q = jnp.einsum('bsd,od->bso', x, wq, precision=hp).reshape(
        B, S, num_heads, hd).transpose(0, 2, 1, 3)
    k = jnp.einsum('bsd,od->bso', x, wk, precision=hp).reshape(
        B, S, num_heads, hd).transpose(0, 2, 1, 3)
    v = jnp.einsum('bsd,od->bso', x, wv, precision=hp).reshape(
        B, S, num_heads, hd).transpose(0, 2, 1, 3)
    scores = jnp.einsum('bhqd,bhkd->bhqk', q, k, precision=hp) / math.sqrt(hd)
    causal = jnp.triu(jnp.ones((S, S), dtype=bool), k=1)
    scores = jnp.where(causal[None, None], -1e9, scores)
    attn = jax.nn.softmax(scores, axis=-1)
    out = jnp.einsum('bhqk,bhkd->bhqd', attn, v, precision=hp)
    out = out.transpose(0, 2, 1, 3).reshape(B, S, D)
    return jnp.einsum('bsd,od->bso', out, wo, precision=hp)


def _run_case(key, B, S, D, num_heads, atol, rtol):
    kx, kq, kk, kv, ko = jax.random.split(key, 5)
    x = jax.random.normal(kx, (B, S, D), dtype=jnp.float32)
    bound = 1.0 / math.sqrt(D)
    wq = jax.random.uniform(kq, (D, D), jnp.float32, -bound, bound)
    wk = jax.random.uniform(kk, (D, D), jnp.float32, -bound, bound)
    wv = jax.random.uniform(kv, (D, D), jnp.float32, -bound, bound)
    wo = jax.random.uniform(ko, (D, D), jnp.float32, -bound, bound)

    out = mha_forward(x, wq, wk, wv, wo, num_heads)
    out = jax.block_until_ready(out)

    ref = reference_mha(x, wq, wk, wv, wo, num_heads)
    assert out.shape == (B, S, D)
    err = float(jnp.max(jnp.abs(out - ref)))
    # Tolerance loosened because the kernel feeds the MXU bf16 inputs
    # (f32 accumulation) while the reference is full f32.
    assert jnp.allclose(out, ref, atol=atol, rtol=rtol), f"mismatch: max abs err {err}"


if __name__ == "__main__":
    key = jax.random.PRNGKey(0)
    k_small, k_big = jax.random.split(key, 2)

    # Small shape matching the module's expected toy config.
    _run_case(k_small, B=2, S=8, D=32, num_heads=8, atol=5e-2, rtol=5e-2)

    # Moderate shape exercising multi-tile flash attention + causal DMA clamp.
    _run_case(k_big, B=1, S=512, D=256, num_heads=4, atol=5e-2, rtol=5e-2)

    print("KERNEL_OK")
</pallas_src>

<mosaic_0001>
module attributes {stable_mosaic.version = 11 : i64} {
  func.func @_proj_kernel_direct(%arg0: i32, %arg1: i32, %arg2: i32, %arg3: memref<16x32xbf16, #tpu.memory_space<vmem>>, %arg4: memref<1x32x4xbf16, #tpu.memory_space<vmem>>, %arg5: memref<1x16x4xbf16, #tpu.memory_space<vmem>>) attributes {dimension_semantics = [#tpu.dimension_semantics<parallel>, #tpu.dimension_semantics<parallel>, #tpu.dimension_semantics<arbitrary>], iteration_bounds = array<i64: 1, 24, 1>, scalar_prefetch = 0 : i64, scratch_operands = 0 : i64, tpu.core_type = #tpu.core_type<tc>, window_params = [{transform_indices = @transform_0, window_bounds = array<i64: 16, 32>}, {transform_indices = @transform_1, window_bounds = array<i64: 1, 32, 4>}, {transform_indices = @transform_2, window_bounds = array<i64: 1, 16, 4>}]} {
    %c0 = arith.constant 0 : index
    %c0_0 = arith.constant 0 : index
    %0 = vector.load %arg3[%c0, %c0_0] : memref<16x32xbf16, #tpu.memory_space<vmem>>, vector<16x32xbf16>
    %c0_1 = arith.constant 0 : index
    %c0_2 = arith.constant 0 : index
    %c0_3 = arith.constant 0 : index
    %1 = vector.load %arg4[%c0_1, %c0_2, %c0_3] : memref<1x32x4xbf16, #tpu.memory_space<vmem>>, vector<1x32x4xbf16>
    %2 = vector.shape_cast %1 : vector<1x32x4xbf16> to vector<32x4xbf16>
    %cst = arith.constant dense<0.000000e+00> : vector<16x4xf32>
    %3 = tpu.matmul %0, %2, %cst {dimension_numbers = #tpu.dot_dimension_numbers<[1], [0], [0], [1], [0, 0, 1, 1], [], []>} : vector<16x32xbf16>, vector<32x4xbf16>, vector<16x4xf32> -> vector<16x4xf32>
    %4 = arith.truncf %3 : vector<16x4xf32> to vector<16x4xbf16>
    %c0_4 = arith.constant 0 : index
    %c0_5 = arith.constant 0 : index
    %c0_6 = arith.constant 0 : index
    %5 = vector.load %arg5[%c0_4, %c0_5, %c0_6] : memref<1x16x4xbf16, #tpu.memory_space<vmem>>, vector<1x16x4xbf16>
    %6 = vector.shape_cast %5 : vector<1x16x4xbf16> to vector<16x4xbf16>
    %7 = vector.shape_cast %4 : vector<16x4xbf16> to vector<1x16x4xbf16>
    tpu.vector_store %arg5[%c0_4, %c0_5, %c0_6], %7 {strides = array<i32>} : memref<1x16x4xbf16, #tpu.memory_space<vmem>>, vector<1x16x4xbf16>,
    return
  }
  func.func @transform_0(%arg0: i32, %arg1: i32, %arg2: i32) -> (i32, i32) {
    %c0_i32 = arith.constant 0 : i32
    return %arg0, %arg2 : i32, i32
  }
  func.func @transform_1(%arg0: i32, %arg1: i32, %arg2: i32) -> (i32, i32, i32) {
    %c0_i32 = arith.constant 0 : i32
    %c0_i32_0 = arith.constant 0 : i32
    return %arg1, %arg2, %c0_i32 : i32, i32, i32
  }
  func.func @transform_2(%arg0: i32, %arg1: i32, %arg2: i32) -> (i32, i32, i32) {
    %c0_i32 = arith.constant 0 : i32
    %c0_i32_0 = arith.constant 0 : i32
    return %arg1, %arg0, %c0_i32 : i32, i32, i32
  }
}

</mosaic_0001>

<llo_original>
// kernel: tpu_custom_call.1
$region0: #{tpu_custom_call.1}
  #allocation0 [shape = 'u32[]', space=smem, size = 0x4, offset = 0x4, fixed_abs, tag = 'smem constant byte address 0x4 - core index']
  #allocation1 [shape = 'u32[72,128]{1,0:T(1,128)}', space=vmem, size = 0x9000, scoped, tag = 'internal scratch']
  %s0 = inlined_call_operand.vmem [shape: bf16[16,32], index: 0, kind: input, shape index: {}]
  %s1 = inlined_call_operand.vmem [shape: bf16[24,32,4], index: 1, kind: input, shape index: {}]
  %s2 = inlined_call_operand.vmem [shape: bf16[24,16,4], index: 2, kind: output, shape index: {}]
  %s3 = sld [smem:[#allocation0]]
  $region41: #{tpu_custom_call.1} parent=0
    _
  %s5 = ssub.s32 1, %s3
  %s6 = scalar_select 0, %s5, %s3
  loop: start=0, step=1, limit=26
  $region2: #{tpu_custom_call.1} parent=0 // loop_pre_header
    _
  $region3: #{tpu_custom_call.1} parent=0 // loop_header
    %s8 = sphi 0, %s12
    %p9 = scmp.ge.s32.totalorder %s8, 26
    %s15 = sphi 0, %s34
    %s16 = sphi 0, %s30
    %s17 = sphi 0, %s26
    %s18 = sphi 0, %s15
    %s19 = sphi 0, %s16
    %s20 = sphi 0, %s17
    %s21 = sphi 0, %s18
    %s22 = sphi 0, %s19
    %s23 = sphi 0, %s20
    %s39 = sphi 0, %s41
    %s42 = sphi 0, %s39
    %s43 = sphi 0, %s42
    %s59 = sphi 0, %s43
    %s67 = sphi 0, %s69
    %s70 = sphi 0, %s67
    %s71 = sphi 0, %s70
    %s87 = sphi 0, %s71
    %s95 = sphi 0, %s97
    %s98 = sphi 0, %s95
    %s99 = sphi 0, %s98
    %s115 = sphi 0, %s99
  $region4: #{tpu_custom_call.1} parent=0 // loop_header_branch
    %11 = sbr.rel (%p9) target = $region8
  $region5: #{tpu_custom_call.1} parent=0 // loop_body
    %s13 = ssub.s32 %s8, 1
    %s14 = ssub.s32 %s8, 2
    %s24 = sadd.s32 1, %s17
    %p25 = scmp.ge.s32.totalorder %s24, 1
    %s26 = scalar_select %p25, 0, %s24
    %s27 = sadd.s32 1, %s16
    %s28 = scalar_select %p25, %s27, %s16
    %p29 = scmp.ge.s32.totalorder %s28, 24
    %s30 = scalar_select %p29, 0, %s28
    %s31 = sadd.s32 1, %s15
    %s32 = scalar_select %p29, %s31, %s15
    %p33 = scmp.ge.s32.totalorder %s32, 1
    %s34 = scalar_select %p33, 0, %s32
    %s35 = ssub.s32 %s15, %s34
    %s36 = ssub.s32 %s17, %s26
    %s37 = sor.u32 %s35, %s36
    %p38 = scmp.eq.s32.totalorder %s37, 0
    %s40 = sadd.s32 %s39, 1
    %s41 = scalar_select %p38, %s39, %s40
    %p44 = pneg %p38
    %p45 = scmp.eq.s32.totalorder %s8, 23
    %p46 = por %p44, %p45
    %p47 = scmp.ne.s32.totalorder %s39, %s42
    %p48 = scmp.eq.s32.totalorder %s8, 0
    %p49 = por %p47, %p48
    %p50 = scmp.ne.s32.totalorder %s39, %s42
    %p51 = scmp.eq.s32.totalorder %s13, 23
    %p52 = por %p50, %p51
    %p53 = scmp.ne.s32.totalorder %s42, %s43
    %p54 = scmp.eq.s32.totalorder %s13, 0
    %p55 = por %p53, %p54
    %p56 = scmp.ne.s32.totalorder %s42, %s43
    %p57 = scmp.eq.s32.totalorder %s14, 23
    %p58 = por %p56, %p57
    %p60 = scmp.ne.s32.totalorder %s43, %s59
    %p61 = scmp.eq.s32.totalorder %s14, 0
    %p62 = por %p60, %p61
    %s63 = ssub.s32 %s16, %s30
    %s64 = ssub.s32 %s17, %s26
    %s65 = sor.u32 %s63, %s64
    %p66 = scmp.eq.s32.totalorder %s65, 0
    %s68 = sadd.s32 %s67, 1
    %s69 = scalar_select %p66, %s67, %s68
    %p72 = pneg %p66
    %p73 = scmp.eq.s32.totalorder %s8, 23
    %p74 = por %p72, %p73
    %p75 = scmp.ne.s32.totalorder %s67, %s70
    %p76 = scmp.eq.s32.totalorder %s8, 0
    %p77 = por %p75, %p76
    %p78 = scmp.ne.s32.totalorder %s67, %s70
    %p79 = scmp.eq.s32.totalorder %s13, 23
    %p80 = por %p78, %p79
    %p81 = scmp.ne.s32.totalorder %s70, %s71
    %p82 = scmp.eq.s32.totalorder %s13, 0
    %p83 = por %p81, %p82
    %p84 = scmp.ne.s32.totalorder %s70, %s71
    %p85 = scmp.eq.s32.totalorder %s14, 23
    %p86 = por %p84, %p85
    %p88 = scmp.ne.s32.totalorder %s71, %s87
    %p89 = scmp.eq.s32.totalorder %s14, 0
    %p90 = por %p88, %p89
    %s91 = ssub.s32 %s16, %s30
    %s92 = ssub.s32 %s15, %s34
    %s93 = sor.u32 %s91, %s92
    %p94 = scmp.eq.s32.totalorder %s93, 0
    %s96 = sadd.s32 %s95, 1
    %s97 = scalar_select %p94, %s95, %s96
    %p100 = pneg %p94
    %p101 = scmp.eq.s32.totalorder %s8, 23
    %p102 = por %p100, %p101
    %p103 = scmp.ne.s32.totalorder %s95, %s98
    %p104 = scmp.eq.s32.totalorder %s8, 0
    %p105 = por %p103, %p104
    %p106 = scmp.ne.s32.totalorder %s95, %s98
    %p107 = scmp.eq.s32.totalorder %s13, 23
    %p108 = por %p106, %p107
    %p109 = scmp.ne.s32.totalorder %s98, %s99
    %p110 = scmp.eq.s32.totalorder %s13, 0
    %p111 = por %p109, %p110
    %p112 = scmp.ne.s32.totalorder %s98, %s99
    %p113 = scmp.eq.s32.totalorder %s14, 23
    %p114 = por %p112, %p113
    %p116 = scmp.ne.s32.totalorder %s99, %s115
    %p117 = scmp.eq.s32.totalorder %s14, 0
    %p118 = por %p116, %p117
    %p119 = scmp.le.s32.totalorder 1, %s8
    %p120 = scmp.lt.s32.totalorder %s8, 25
    %p121 = pnand %p119, %p120
    %p122 = pneg %p121
    // Predicated region
    $region9: #{tpu_custom_call.1} parent=5 // pred_check
      _
    $region10: #{tpu_custom_call.1} parent=5 // pred_check_branch
      %124 = sbr.rel (%p121) target = $region12
    $region11: #{tpu_custom_call.1} parent=5 // pred_region
      %s125 = ssub.s32 %s8, 1
      // Predicated region
      $region13: #{tpu_custom_call.1} parent=11 // pred_check
        %p126 = pneg %p55
      $region14: #{tpu_custom_call.1} parent=11 // pred_check_branch
        %128 = sbr.rel (%p126) target = $region16
      $region15: #{tpu_custom_call.1} parent=11 // pred_region
        %s129 = smul.u32 2, %s18
        %p130 = scmp.lt.s32.totalorder %s129, 1
        %s131 = scalar_select %p130, %s129, 1
        %p132 = scmp.lt.s32.totalorder %s20, 0
        %s133 = scalar_select %p132, %s20, 0
        %s134 = sadd.s32 %s133, %s131
        %s135 = smul.addr %s134, 4
        %s136 = scalar_lea.vmem %s0, %s135
        %s137 = smul.u32 2, %s18
      $region16: #{tpu_custom_call.1} parent=11 // pred_fallthru
        _
    $region12: #{tpu_custom_call.1} parent=5 // pred_fallthru
      _
    %p138 = scmp.lt.s32.totalorder %s8, 24
    // Predicated region
    $region17: #{tpu_custom_call.1} parent=5 // pred_check
      %p139 = pneg %p138
    $region18: #{tpu_custom_call.1} parent=5 // pred_check_branch
      %141 = sbr.rel (%p139) target = $region20
    $region19: #{tpu_custom_call.1} parent=5 // pred_region
      // Predicated region
      $region21: #{tpu_custom_call.1} parent=19 // pred_check
        %p142 = pneg %p77
      $region22: #{tpu_custom_call.1} parent=19 // pred_check_branch
        %144 = sbr.rel (%p142) target = $region24
      $region23: #{tpu_custom_call.1} parent=19 // pred_region
        %s145 = smul.u32 4, %s17
        %p146 = scmp.lt.s32.totalorder %s16, 23
        %s147 = scalar_select %p146, %s16, 23
        %p148 = scmp.lt.s32.totalorder %s145, 3
        %s149 = scalar_select %p148, %s145, 3
        %s150 = smul.addr %s147, 4
        %s151 = sadd.s32 %s149, %s150
        %s152 = smul.addr %s151, 4
        %s153 = scalar_lea.vmem %s1, %s152
        %s154 = smul.u32 4, %s17
      $region24: #{tpu_custom_call.1} parent=19 // pred_fallthru
        _
    $region20: #{tpu_custom_call.1} parent=5 // pred_fallthru
      _
    %p155 = scmp.le.s32.totalorder 1, %s8
    %p156 = scmp.lt.s32.totalorder %s8, 25
    %p157 = pnand %p155, %p156
    %p158 = pneg %p157
    // Predicated region
    $region25: #{tpu_custom_call.1} parent=5 // pred_check
      _
    $region26: #{tpu_custom_call.1} parent=5 // pred_check_branch
      %160 = sbr.rel (%p157) target = $region28
    $region27: #{tpu_custom_call.1} parent=5 // pred_region
      %s161 = ssub.s32 %s8, 1
      %s162 = smul.u32 2, %s18
      %p163 = scmp.lt.s32.totalorder %s162, 1
      %s164 = scalar_select %p163, %s162, 1
      %p165 = scmp.lt.s32.totalorder %s20, 0
      %s166 = scalar_select %p165, %s20, 0
      %s167 = sadd.s32 %s166, %s164
      %s168 = smul.addr %s167, 4
      %s169 = scalar_lea.vmem %s0, %s168
      %p170 = pneg %p55
      %p171 = pneg %p52
      %s172 = smul.u32 4, %s20
      %p173 = scmp.lt.s32.totalorder %s19, 23
      %s174 = scalar_select %p173, %s19, 23
      %p175 = scmp.lt.s32.totalorder %s172, 3
      %s176 = scalar_select %p175, %s172, 3
      %s177 = smul.addr %s174, 4
      %s178 = sadd.s32 %s176, %s177
      %s179 = smul.addr %s178, 4
      %s180 = scalar_lea.vmem %s1, %s179
      %p181 = pneg %p83
      %p182 = pneg %p80
      %p183 = pneg %p111
      %p184 = pneg %p108
      %s185 = smul.u32 2, %s18
      %p186 = scmp.lt.s32.totalorder %s19, 23
      %s187 = scalar_select %p186, %s19, 23
      %p188 = scmp.lt.s32.totalorder %s185, 1
      %s189 = scalar_select %p188, %s185, 1
      %s190 = smul.addr %s187, 2
      %s191 = sadd.s32 %s189, %s190
      %s192 = smul.addr %s191, 4
      %s193 = scalar_lea.vmem %s2, %s192
      %s194 = smul.u32 2, %s18
      %p195 = scmp.lt.s32.totalorder %s194, 1
      %s196 = scalar_select %p195, %s194, 1
      %p197 = scmp.lt.s32.totalorder %s20, 0
      %s198 = scalar_select %p197, %s20, 0
      %s199 = sadd.s32 %s198, %s196
      %s200 = smul.addr %s199, 4
      %s201 = scalar_lea.vmem %s0, %s200
      %s202 = smul.u32 2, %s18
      %s203 = smul.u32 4, %s20
      %p204 = scmp.lt.s32.totalorder %s19, 23
      %s205 = scalar_select %p204, %s19, 23
      %p206 = scmp.lt.s32.totalorder %s203, 3
      %s207 = scalar_select %p206, %s203, 3
      %s208 = smul.addr %s205, 4
      %s209 = sadd.s32 %s207, %s208
      %s210 = smul.addr %s209, 4
      %s211 = scalar_lea.vmem %s1, %s210
      %s212 = smul.u32 4, %s20
      %s213 = smul.u32 2, %s18
      %p214 = scmp.lt.s32.totalorder %s19, 23
      %s215 = scalar_select %p214, %s19, 23
      %p216 = scmp.lt.s32.totalorder %s213, 1
      %s217 = scalar_select %p216, %s213, 1
      %s218 = smul.addr %s215, 2
      %s219 = sadd.s32 %s217, %s218
      %s220 = smul.addr %s219, 4
      %s221 = scalar_lea.vmem %s2, %s220
      %s222 = smul.u32 2, %s18
      %v224 = vld [vmem:[%s201] sm:$0xf]
      %v225 = vld [vmem:[%s201 + $0x4] sm:$0xf]
      %v226 = vld [vmem:[%s211] sm:$0xf]
      %v227 = vld [vmem:[%s211 + $0x4] sm:$0xf]
      %v228 = vld [vmem:[%s211 + $0x8] sm:$0xf]
      %v229 = vld [vmem:[%s211 + $0xc] sm:$0xf]
      %v232 = vunpack.c.l.b16 %v224
      %v233 = vunpack.c.l.b16 %v225
      %v234 = vpack.c.b16 %v233, %v232
      %v239 = vunpack.c.l.b16 %v226
      %v240 = vunpack.c.l.b16 %v227
      %v241 = vunpack.c.l.b16 %v228
      %v242 = vunpack.c.l.b16 %v229
      %v243 = vpack.c.b16 %v240, %v239
      %v244 = vpack.c.b16 %v242, %v241
      %vm247 = vcmask 261120
      %v249 = vsel %vm247, %v234, 0
      %251 = vmatpush.bf16.msra.mxu0 0
      %252 = vmatpush.bf16.msra.mxu0 0
      %253 = vmatpush.bf16.msra.mxu0 0
      %254 = vmatpush.bf16.msra.mxu0 0
      %255 = vmatpush.bf16.msra.mxu0 0
      %256 = vmatpush.bf16.msra.mxu0 0
      %257 = vmatpush.bf16.msra.mxu0 %v244
      %258 = vmatpush.bf16.msra.mxu0 %v243
      %259 = vmatmul.bf16.gmra.mxu0 %v249
      %v260 = vpop.f32.mrf.mxu0
      %v261 = vadd.f32 0.0, %v260
      %v262 = vpop.f32.mrf.mxu0
      %v263 = vadd.f32 0.0, %v262
      %264 = vdwg.mxu0
      %v265 = vpack.c.bf16 %v261, %v261
      %v266 = vpack.c.bf16 %v263, %v263
      %vm267 = vcmask 27648
      %268 = vst.msk [vmem:[%s221] sm:$0xf] %vm267, %v265
      %269 = vst.msk [vmem:[%s221 + $0x4] sm:$0xf] %vm267, %v266
      %s270 = smul.u32 2, %s18
      %p271 = scmp.lt.s32.totalorder %s19, 23
      %s272 = scalar_select %p271, %s19, 23
      %p273 = scmp.lt.s32.totalorder %s270, 1
      %s274 = scalar_select %p273, %s270, 1
      %s275 = smul.addr %s272, 2
      %s276 = sadd.s32 %s274, %s275
      %s277 = smul.addr %s276, 4
      %s278 = scalar_lea.vmem %s2, %s277
      // Predicated region
      $region29: #{tpu_custom_call.1} parent=27 // pred_check
        %p279 = pneg %p108
      $region30: #{tpu_custom_call.1} parent=27 // pred_check_branch
        %281 = sbr.rel (%p279) target = $region32
      $region31: #{tpu_custom_call.1} parent=27 // pred_region
        %s282 = smul.u32 2, %s18
      $region32: #{tpu_custom_call.1} parent=27 // pred_fallthru
        _
    $region28: #{tpu_custom_call.1} parent=5 // pred_fallthru
      _
    %p283 = scmp.le.s32.totalorder 2, %s8
    // Predicated region
    $region33: #{tpu_custom_call.1} parent=5 // pred_check
      %p284 = pneg %p283
    $region34: #{tpu_custom_call.1} parent=5 // pred_check_branch
      %286 = sbr.rel (%p284) target = $region36
    $region35: #{tpu_custom_call.1} parent=5 // pred_region
      %s287 = ssub.s32 %s8, 2
      // Predicated region
      $region37: #{tpu_custom_call.1} parent=35 // pred_check
        %p288 = pneg %p114
      $region38: #{tpu_custom_call.1} parent=35 // pred_check_branch
        %290 = sbr.rel (%p288) target = $region40
      $region39: #{tpu_custom_call.1} parent=35 // pred_region
        %s291 = smul.u32 2, %s21
        %p292 = scmp.lt.s32.totalorder %s22, 23
        %s293 = scalar_select %p292, %s22, 23
        %p294 = scmp.lt.s32.totalorder %s291, 1
        %s295 = scalar_select %p294, %s291, 1
        %s296 = smul.addr %s293, 2
        %s297 = sadd.s32 %s295, %s296
        %s298 = smul.addr %s297, 4
        %s299 = scalar_lea.vmem %s2, %s298
      $region40: #{tpu_custom_call.1} parent=35 // pred_fallthru
        _
    $region36: #{tpu_custom_call.1} parent=5 // pred_fallthru
      _
  $region6: #{tpu_custom_call.1} parent=0 // loop_footer
    %s12 = sadd.s32 1, %s8
  $region7: #{tpu_custom_call.1} parent=0 // loop_footer_branch
    %7 = sbr.rel target = $region3
  $region8: #{tpu_custom_call.1} parent=0 // loop_exit
    _

</llo_original>
